<compile_context>
chip_gen: v7x
topology: tpu7x:2x2x1
jax: 0.10.0
libtpu: 0.0.40
codegen_flags: <defaults>
</compile_context>

<pallas_src>
import functools
import math

import jax
import jax.numpy as jnp
from jax.experimental import pallas as pl
from jax.experimental.pallas import tpu as pltpu

_HALF_LOG_2PI = 0.5 * math.log(2.0 * math.pi)
_LOG2 = math.log(2.0)


def _policy_kernel(x_ref, w1_ref, b1_ref, wh_ref, bh_ref, eps_ref, out_ref, *,
                   action_bound, ap):
    # fc1 + ReLU: bf16 operands on the MXU, f32 accumulation, f32 elementwise.
    h = jnp.dot(x_ref[...], w1_ref[...], preferred_element_type=jnp.float32)
    h = jnp.maximum(h + b1_ref[...], 0.0)

    # Fused mu/std heads: one matmul into a lane-padded (TB, 2*AP) slab.
    heads = jnp.dot(h.astype(wh_ref.dtype), wh_ref[...],
                    preferred_element_type=jnp.float32) + bh_ref[...]
    mu = heads[:, :ap]
    std_pre = heads[:, ap:]
    std = jnp.logaddexp(std_pre, 0.0)          # softplus, numerically stable, f32

    # rsample: u = mu + std * eps. For Normal(mu, std).log_prob(u), z == eps
    # exactly, so no subtraction/division is needed.
    eps = eps_ref[...]
    u = mu + std * eps
    log_prob = -0.5 * eps * eps - jnp.log(std) - _HALF_LOG_2PI

    # tanh log-det correction via the exact, saturation-safe identity:
    #   log(1 - tanh(u)^2) = 2*(log 2 - u - softplus(-2u))
    log_prob = log_prob - 2.0 * (_LOG2 - u - jnp.logaddexp(-2.0 * u, 0.0))

    action = jnp.tanh(u) * action_bound

    # One lane-dense (TB, 2*AP) store: [action | log_prob].
    out_ref[...] = jnp.concatenate([action, log_prob], axis=-1)


def policy_net_continuous(x, params, eps, action_bound, *, block_batch=512):
    """Forward pass of PolicyNetContinuous. Returns (action, log_prob)."""
    w1, b1, w_mu, b_mu, w_std, b_std = params
    batch, state_dim = x.shape
    hidden_dim, action_dim = w_mu.shape

    # Lane-pad the head width so [mu | std] and [action | log_prob] slabs are
    # 128-lane dense and mu/std slices land on vreg boundaries.
    ap = ((action_dim + 127) // 128) * 128
    two_ap = 2 * ap

    # Pack + pad the two head projections into one weight / bias.
    w_heads = jnp.zeros((hidden_dim, two_ap), jnp.float32)
    w_heads = w_heads.at[:, :action_dim].set(w_mu)
    w_heads = w_heads.at[:, ap:ap + action_dim].set(w_std)
    b_heads = jnp.zeros((1, two_ap), jnp.float32)
    b_heads = b_heads.at[:, :action_dim].set(b_mu)
    b_heads = b_heads.at[:, ap:ap + action_dim].set(b_std)

    # bf16 MXU operands (f32 accumulation inside the kernel).
    x_bf = x.astype(jnp.bfloat16)
    w1_bf = w1.astype(jnp.bfloat16)
    w_heads_bf = w_heads.astype(jnp.bfloat16)

    # Pad eps to the lane-padded action width (zeros in the padding).
    eps_p = jnp.zeros((batch, ap), jnp.float32).at[:, :action_dim].set(eps)
    # TODO(synk): optionally draw eps in-kernel with pltpu.prng_seed +
    # pltpu.stateful_normal (seed via scalar prefetch) to drop this input.

    tb = min(batch, block_batch)
    grid = (pl.cdiv(batch, tb),)

    kernel = functools.partial(_policy_kernel,
                               action_bound=float(action_bound), ap=ap)

    def full_spec(shape):
        return pl.BlockSpec(shape, lambda i: (0, 0))

    in_specs = [
        pl.BlockSpec((tb, state_dim), lambda i: (i, 0)),   # x   (blocked batch)
        full_spec((state_dim, hidden_dim)),                # w1  (resident)
        full_spec((1, hidden_dim)),                        # b1
        full_spec((hidden_dim, two_ap)),                   # packed heads W
        full_spec((1, two_ap)),                            # packed heads b
        pl.BlockSpec((tb, ap), lambda i: (i, 0)),          # eps (blocked batch)
    ]
    out_spec = pl.BlockSpec((tb, two_ap), lambda i: (i, 0))

    flops = 2 * batch * (state_dim * hidden_dim + hidden_dim * two_ap)
    transcendentals = 6 * batch * ap
    bytes_accessed = (
        2 * batch * state_dim                              # x (bf16)
        + 2 * (state_dim * hidden_dim + hidden_dim * two_ap)  # weights (bf16)
        + 4 * (hidden_dim + two_ap)                        # biases (f32)
        + 4 * batch * ap                                   # eps (f32)
        + 4 * batch * two_ap)                              # output slab (f32)

    out = pl.pallas_call(
        kernel,
        out_shape=jax.ShapeDtypeStruct((batch, two_ap), jnp.float32),
        grid=grid,
        in_specs=in_specs,
        out_specs=out_spec,
        compiler_params=pltpu.CompilerParams(
            dimension_semantics=("parallel",),
            vmem_limit_bytes=32 * 1024 * 1024),
        cost_estimate=pl.CostEstimate(
            flops=flops, transcendentals=transcendentals,
            bytes_accessed=bytes_accessed),
    )(x_bf, w1_bf, b1, w_heads_bf, b_heads, eps_p)

    action = out[:, :action_dim]
    log_prob = out[:, ap:ap + action_dim]
    return action, log_prob


def _reference(x, params, eps, action_bound):
    """Pure-JAX reference with the same bf16-matmul / f32-elementwise recipe."""
    w1, b1, w_mu, b_mu, w_std, b_std = params
    h = jnp.maximum(
        jnp.dot(x.astype(jnp.bfloat16), w1.astype(jnp.bfloat16),
                preferred_element_type=jnp.float32) + b1, 0.0)
    h_bf = h.astype(jnp.bfloat16)
    mu = jnp.dot(h_bf, w_mu.astype(jnp.bfloat16),
                 preferred_element_type=jnp.float32) + b_mu
    std_pre = jnp.dot(h_bf, w_std.astype(jnp.bfloat16),
                      preferred_element_type=jnp.float32) + b_std
    std = jax.nn.softplus(std_pre)
    u = mu + std * eps
    log_prob = (-0.5 * eps * eps - jnp.log(std) - _HALF_LOG_2PI
                - 2.0 * (_LOG2 - u - jax.nn.softplus(-2.0 * u)))
    action = jnp.tanh(u) * action_bound
    return action, log_prob


def init_params(key, state_dim, hidden_dim, action_dim):
    """Deterministic synthetic parameters (PyTorch-Linear-like uniform init)."""
    ks = jax.random.split(key, 6)

    def uniform(k, shape, fan_in):
        bound = 1.0 / math.sqrt(float(fan_in))
        return jax.random.uniform(k, shape, jnp.float32, -bound, bound)

    # Weights stored as (in, out) == transposed PyTorch Linear weight.
    w1 = uniform(ks[0], (state_dim, hidden_dim), state_dim)
    b1 = uniform(ks[1], (1, hidden_dim), state_dim)
    w_mu = uniform(ks[2], (hidden_dim, action_dim), hidden_dim)
    b_mu = uniform(ks[3], (1, action_dim), hidden_dim)
    w_std = uniform(ks[4], (hidden_dim, action_dim), hidden_dim)
    b_std = uniform(ks[5], (1, action_dim), hidden_dim)
    return w1, b1, w_mu, b_mu, w_std, b_std


if __name__ == "__main__":
    batch = 8
    state_dim = 16
    hidden_dim = 32
    action_dim = 8
    action_bound = 2.0

    key = jax.random.PRNGKey(0)
    k_x, k_p, k_eps = jax.random.split(key, 3)

    x = jax.random.normal(k_x, (batch, state_dim), jnp.float32)
    params = init_params(k_p, state_dim, hidden_dim, action_dim)
    eps = jax.random.normal(k_eps, (batch, action_dim), jnp.float32)  # rsample noise

    action, log_prob = policy_net_continuous(x, params, eps, action_bound)
    jax.block_until_ready((action, log_prob))

    ref_action, ref_logp = _reference(x, params, eps, action_bound)

    assert action.shape == (batch, action_dim)
    assert log_prob.shape == (batch, action_dim)
    assert bool(jnp.all(jnp.isfinite(action))) and bool(jnp.all(jnp.isfinite(log_prob)))
    assert bool(jnp.all(jnp.abs(action) <= action_bound + 1e-5))
    assert bool(jnp.allclose(action, ref_action, atol=1e-2, rtol=1e-2))
    assert bool(jnp.allclose(log_prob, ref_logp, atol=1e-2, rtol=1e-2))

    print("KERNEL_OK")
</pallas_src>

<mosaic_0001>
module attributes {stable_mosaic.version = 11 : i64} {
  func.func @_policy_kernel(%arg0: i32, %arg1: memref<8x16xbf16, #tpu.memory_space<vmem>>, %arg2: memref<16x32xbf16, #tpu.memory_space<vmem>>, %arg3: memref<1x32xf32, #tpu.memory_space<vmem>>, %arg4: memref<32x256xbf16, #tpu.memory_space<vmem>>, %arg5: memref<1x256xf32, #tpu.memory_space<vmem>>, %arg6: memref<8x128xf32, #tpu.memory_space<vmem>>, %arg7: memref<8x256xf32, #tpu.memory_space<vmem>>) attributes {dimension_semantics = [#tpu.dimension_semantics<parallel>], iteration_bounds = array<i64: 1>, scalar_prefetch = 0 : i64, scratch_operands = 0 : i64, tpu.core_type = #tpu.core_type<tc>, window_params = [{transform_indices = @transform_0, window_bounds = array<i64: 8, 16>}, {pipeline_mode = #tpu.pipeline_mode<synchronous>, transform_indices = @transform_1, window_bounds = array<i64: 16, 32>}, {pipeline_mode = #tpu.pipeline_mode<synchronous>, transform_indices = @transform_2, window_bounds = array<i64: 1, 32>}, {pipeline_mode = #tpu.pipeline_mode<synchronous>, transform_indices = @transform_3, window_bounds = array<i64: 32, 256>}, {pipeline_mode = #tpu.pipeline_mode<synchronous>, transform_indices = @transform_4, window_bounds = array<i64: 1, 256>}, {transform_indices = @transform_5, window_bounds = array<i64: 8, 128>}, {transform_indices = @transform_6, window_bounds = array<i64: 8, 256>}]} {
    %c0 = arith.constant 0 : index
    %c0_0 = arith.constant 0 : index
    %0 = vector.load %arg1[%c0, %c0_0] : memref<8x16xbf16, #tpu.memory_space<vmem>>, vector<8x16xbf16>
    %c0_1 = arith.constant 0 : index
    %c0_2 = arith.constant 0 : index
    %1 = vector.load %arg2[%c0_1, %c0_2] : memref<16x32xbf16, #tpu.memory_space<vmem>>, vector<16x32xbf16>
    %cst = arith.constant dense<0.000000e+00> : vector<8x32xf32>
    %2 = tpu.matmul %0, %1, %cst {dimension_numbers = #tpu.dot_dimension_numbers<[1], [0], [0], [1], [0, 0, 1, 1], [], []>} : vector<8x16xbf16>, vector<16x32xbf16>, vector<8x32xf32> -> vector<8x32xf32>
    %c0_3 = arith.constant 0 : index
    %c0_4 = arith.constant 0 : index
    %3 = vector.load %arg3[%c0_3, %c0_4] : memref<1x32xf32, #tpu.memory_space<vmem>>, vector<1x32xf32>
    %4 = vector.broadcast %3 : vector<1x32xf32> to vector<8x32xf32>
    %5 = arith.addf %2, %4 : vector<8x32xf32>
    %cst_5 = arith.constant 0.000000e+00 : f32
    %6 = vector.broadcast %cst_5 : f32 to vector<8x32xf32>
    %7 = arith.maximumf %5, %6 : vector<8x32xf32>
    %8 = arith.truncf %7 : vector<8x32xf32> to vector<8x32xbf16>
    %c0_6 = arith.constant 0 : index
    %c0_7 = arith.constant 0 : index
    %9 = vector.load %arg4[%c0_6, %c0_7] : memref<32x256xbf16, #tpu.memory_space<vmem>>, vector<32x256xbf16>
    %cst_8 = arith.constant dense<0.000000e+00> : vector<8x256xf32>
    %10 = tpu.matmul %8, %9, %cst_8 {dimension_numbers = #tpu.dot_dimension_numbers<[1], [0], [0], [1], [0, 0, 1, 1], [], []>} : vector<8x32xbf16>, vector<32x256xbf16>, vector<8x256xf32> -> vector<8x256xf32>
    %c0_9 = arith.constant 0 : index
    %c0_10 = arith.constant 0 : index
    %11 = vector.load %arg5[%c0_9, %c0_10] : memref<1x256xf32, #tpu.memory_space<vmem>>, vector<1x256xf32>
    %12 = vector.broadcast %11 : vector<1x256xf32> to vector<8x256xf32>
    %13 = arith.addf %10, %12 : vector<8x256xf32>
    %14 = vector.extract_strided_slice %13 {offsets = [0, 0], sizes = [8, 128], strides = [1, 1]} : vector<8x256xf32> to vector<8x128xf32>
    %15 = vector.extract_strided_slice %13 {offsets = [0, 128], sizes = [8, 128], strides = [1, 1]} : vector<8x256xf32> to vector<8x128xf32>
    %cst_11 = arith.constant 0.000000e+00 : f32
    %16 = vector.broadcast %cst_11 : f32 to vector<8x128xf32>
    %17 = arith.maximumf %15, %16 : vector<8x128xf32>
    %18 = vector.broadcast %cst_11 : f32 to vector<8x128xf32>
    %19 = arith.subf %15, %18 : vector<8x128xf32>
    %20 = arith.cmpf one, %19, %19 : vector<8x128xf32>
    %21 = vector.broadcast %cst_11 : f32 to vector<8x128xf32>
    %22 = arith.addf %15, %21 : vector<8x128xf32>
    %23 = math.absf %19 : vector<8x128xf32>
    %cst_12 = arith.constant 0.000000e+00 : f32
    %24 = vector.broadcast %cst_12 : f32 to vector<8x128xf32>
    %25 = arith.subf %24, %23 : vector<8x128xf32>
    %26 = math.exp %25 : vector<8x128xf32>
    %27 = math.log1p %26 : vector<8x128xf32>
    %28 = arith.addf %17, %27 : vector<8x128xf32>
    %29 = arith.select %20, %22, %28 : vector<8x128xi1>, vector<8x128xf32>
    %c0_13 = arith.constant 0 : index
    %c0_14 = arith.constant 0 : index
    %30 = vector.load %arg6[%c0_13, %c0_14] : memref<8x128xf32, #tpu.memory_space<vmem>>, vector<8x128xf32>
    %31 = arith.mulf %29, %30 : vector<8x128xf32>
    %32 = arith.addf %14, %31 : vector<8x128xf32>
    %cst_15 = arith.constant -5.000000e-01 : f32
    %33 = vector.broadcast %cst_15 : f32 to vector<8x128xf32>
    %34 = arith.mulf %33, %30 : vector<8x128xf32>
    %35 = arith.mulf %34, %30 : vector<8x128xf32>
    %36 = math.log %29 : vector<8x128xf32>
    %37 = arith.subf %35, %36 : vector<8x128xf32>
    %cst_16 = arith.constant 0.918938517 : f32
    %38 = vector.broadcast %cst_16 : f32 to vector<8x128xf32>
    %39 = arith.subf %37, %38 : vector<8x128xf32>
    %cst_17 = arith.constant 0.693147182 : f32
    %40 = vector.broadcast %cst_17 : f32 to vector<8x128xf32>
    %41 = arith.subf %40, %32 : vector<8x128xf32>
    %cst_18 = arith.constant -2.000000e+00 : f32
    %42 = vector.broadcast %cst_18 : f32 to vector<8x128xf32>
    %43 = arith.mulf %42, %32 : vector<8x128xf32>
    %cst_19 = arith.constant 0.000000e+00 : f32
    %44 = vector.broadcast %cst_19 : f32 to vector<8x128xf32>
    %45 = arith.maximumf %43, %44 : vector<8x128xf32>
    %46 = vector.broadcast %cst_19 : f32 to vector<8x128xf32>
    %47 = arith.subf %43, %46 : vector<8x128xf32>
    %48 = arith.cmpf one, %47, %47 : vector<8x128xf32>
    %49 = vector.broadcast %cst_19 : f32 to vector<8x128xf32>
    %50 = arith.addf %43, %49 : vector<8x128xf32>
    %51 = math.absf %47 : vector<8x128xf32>
    %cst_20 = arith.constant 0.000000e+00 : f32
    %52 = vector.broadcast %cst_20 : f32 to vector<8x128xf32>
    %53 = arith.subf %52, %51 : vector<8x128xf32>
    %54 = math.exp %53 : vector<8x128xf32>
    %55 = math.log1p %54 : vector<8x128xf32>
    %56 = arith.addf %45, %55 : vector<8x128xf32>
    %57 = arith.select %48, %50, %56 : vector<8x128xi1>, vector<8x128xf32>
    %58 = arith.subf %41, %57 : vector<8x128xf32>
    %cst_21 = arith.constant 2.000000e+00 : f32
    %59 = vector.broadcast %cst_21 : f32 to vector<8x128xf32>
    %60 = arith.mulf %59, %58 : vector<8x128xf32>
    %61 = arith.subf %39, %60 : vector<8x128xf32>
    %62 = math.tanh %32 : vector<8x128xf32>
    %cst_22 = arith.constant 2.000000e+00 : f32
    %63 = vector.broadcast %cst_22 : f32 to vector<8x128xf32>
    %64 = arith.mulf %62, %63 : vector<8x128xf32>
    %65 = tpu.concatenate %64, %61 in 1 : vector<8x128xf32>, vector<8x128xf32> -> vector<8x256xf32>
    %c0_23 = arith.constant 0 : index
    %c0_24 = arith.constant 0 : index
    %66 = vector.load %arg7[%c0_23, %c0_24] : memref<8x256xf32, #tpu.memory_space<vmem>>, vector<8x256xf32>
    tpu.vector_store %arg7[%c0_23, %c0_24], %65 {strides = array<i32>} : memref<8x256xf32, #tpu.memory_space<vmem>>, vector<8x256xf32>,
    return
  }
  func.func @transform_0(%arg0: i32) -> (i32, i32) {
    %c0_i32 = arith.constant 0 : i32
    %c0_i32_0 = arith.constant 0 : i32
    return %arg0, %c0_i32 : i32, i32
  }
  func.func @transform_1(%arg0: i32) -> (i32, i32) {
    %c0_i32 = arith.constant 0 : i32
    %c0_i32_0 = arith.constant 0 : i32
    %c0_i32_1 = arith.constant 0 : i32
    return %c0_i32, %c0_i32_0 : i32, i32
  }
  func.func @transform_2(%arg0: i32) -> (i32, i32) {
    %c0_i32 = arith.constant 0 : i32
    %c0_i32_0 = arith.constant 0 : i32
    %c0_i32_1 = arith.constant 0 : i32
    return %c0_i32, %c0_i32_0 : i32, i32
  }
  func.func @transform_3(%arg0: i32) -> (i32, i32) {
    %c0_i32 = arith.constant 0 : i32
    %c0_i32_0 = arith.constant 0 : i32
    %c0_i32_1 = arith.constant 0 : i32
    return %c0_i32, %c0_i32_0 : i32, i32
  }
  func.func @transform_4(%arg0: i32) -> (i32, i32) {
    %c0_i32 = arith.constant 0 : i32
    %c0_i32_0 = arith.constant 0 : i32
    %c0_i32_1 = arith.constant 0 : i32
    return %c0_i32, %c0_i32_0 : i32, i32
  }
  func.func @transform_5(%arg0: i32) -> (i32, i32) {
    %c0_i32 = arith.constant 0 : i32
    %c0_i32_0 = arith.constant 0 : i32
    return %arg0, %c0_i32 : i32, i32
  }
  func.func @transform_6(%arg0: i32) -> (i32, i32) {
    %c0_i32 = arith.constant 0 : i32
    %c0_i32_0 = arith.constant 0 : i32
    return %arg0, %c0_i32 : i32, i32
  }
}

</mosaic_0001>

<llo_original>
// kernel: tpu_custom_call.1
$region0: #{tpu_custom_call.1}
  #allocation0 [shape = 'u32[]', space=smem, size = 0x4, offset = 0x4, fixed_abs, tag = 'smem constant byte address 0x4 - core index']
  #allocation1 [shape = 'u32[144,128]{1,0:T(1,128)}', space=vmem, size = 0x12000, scoped, tag = 'internal scratch']
  %s0 = inlined_call_operand.hbm [shape: bf16[8,16], index: 0, kind: input, shape index: {}]
  %s1 = inlined_call_operand.hbm [shape: bf16[16,32], index: 1, kind: input, shape index: {}]
  %s2 = inlined_call_operand.vmem [shape: f32[1,32], index: 2, kind: input, shape index: {}]
  %s3 = inlined_call_operand.hbm [shape: bf16[32,256], index: 3, kind: input, shape index: {}]
  %s4 = inlined_call_operand.vmem [shape: f32[1,256], index: 4, kind: input, shape index: {}]
  %s5 = inlined_call_operand.vmem [shape: f32[8,128], index: 5, kind: input, shape index: {}]
  %s6 = inlined_call_operand.hbm [shape: f32[8,256], index: 6, kind: output, shape index: {}]
  %s7 = sld [smem:[#allocation0]]
  $region46: #{tpu_custom_call.1} parent=0
    _
  %s9 = ssub.s32 1, %s7
  %s10 = scalar_select 0, %s9, %s7
  $region1: #{tpu_custom_call.1} parent=0
    #allocation2 [shape = 'u8[2048]{0}', space=vmem, size = 0x800, scoped, tag = 'input window, operand 0, single buffered']
    #allocation3 [shape = 's32[1]{0}', space=sflag, size = 0x4, scoped, tag = 'scoped memory for tpu_custom_call.1']
    #allocation4 [shape = 's32[1]{0}', space=sflag, size = 0x4, scoped, tag = 'scoped memory for tpu_custom_call.1']
    #allocation5 [shape = 'u8[4096]{0}', space=vmem, size = 0x1000, scoped, tag = 'input window, operand 1, single buffered']
    #allocation6 [shape = 's32[1]{0}', space=sflag, size = 0x4, scoped, tag = 'scoped memory for tpu_custom_call.1']
    #allocation7 [shape = 'u8[16384]{0}', space=vmem, size = 0x4000, scoped, tag = 'input window, operand 3, single buffered']
    #allocation8 [shape = 'u8[8192]{0}', space=vmem, size = 0x2000, scoped, tag = 'output window, operand 0, single buffered']
    %11 = vsyncpa [#allocation3], 0
    %12 = vsyncpa [#allocation6], 0
    %13 = vsyncpa [#allocation4], 0
    // Predicated region
    $region2: #{tpu_custom_call.1} parent=1 // pred_check
      _
    $region3: #{tpu_custom_call.1} parent=1 // pred_check_branch
      %15 = sbr.rel (0) target = $region5
    $region4: #{tpu_custom_call.1} parent=1 // pred_region
      %s17 = ssub.s32 64, 64
      %18 = vsyncadd [#allocation3], %s17
      %s20 = sshll.u32 [#allocation2], 4
      %s21 = int_to_ptr.vmem [resolvable:$true] %s20
      %23 = dma.hbm_to_vmem [thread:$0]  %s0, 64, %s21, [#allocation3]
    $region5: #{tpu_custom_call.1} parent=1 // pred_fallthru
      _
    // Predicated region
    $region6: #{tpu_custom_call.1} parent=1 // pred_check
      _
    $region7: #{tpu_custom_call.1} parent=1 // pred_check_branch
      %25 = sbr.rel (0) target = $region9
    $region8: #{tpu_custom_call.1} parent=1 // pred_region
      %s27 = ssub.s32 128, 128
      %28 = vsyncadd [#allocation6], %s27
      %s29 = sshll.u32 [#allocation5], 4
      %s30 = int_to_ptr.vmem [resolvable:$true] %s29
      %35 = dma.hbm_to_vmem [thread:$0]  %s1, 128, %s30, [#allocation6], 64, 64, 4
    $region9: #{tpu_custom_call.1} parent=1 // pred_fallthru
      _
    // Predicated region
    $region10: #{tpu_custom_call.1} parent=1 // pred_check
      _
    $region11: #{tpu_custom_call.1} parent=1 // pred_check_branch
      %37 = sbr.rel (0) target = $region13
    $region12: #{tpu_custom_call.1} parent=1 // pred_region
      _
    $region13: #{tpu_custom_call.1} parent=1 // pred_fallthru
      _
    // Predicated region
    $region14: #{tpu_custom_call.1} parent=1 // pred_check
      _
    $region15: #{tpu_custom_call.1} parent=1 // pred_check_branch
      %39 = sbr.rel (0) target = $region17
    $region16: #{tpu_custom_call.1} parent=1 // pred_region
      %s41 = ssub.s32 512, 512
      %42 = vsyncadd [#allocation6], %s41
      %s43 = sshll.u32 [#allocation7], 4
      %s44 = int_to_ptr.vmem [resolvable:$true] %s43
      %49 = dma.hbm_to_vmem [thread:$0]  %s3, 512, %s44, [#allocation6], 128, 128, 8
    $region17: #{tpu_custom_call.1} parent=1 // pred_fallthru
      _
    // Predicated region
    $region18: #{tpu_custom_call.1} parent=1 // pred_check
      _
    $region19: #{tpu_custom_call.1} parent=1 // pred_check_branch
      %51 = sbr.rel (0) target = $region21
    $region20: #{tpu_custom_call.1} parent=1 // pred_region
      _
    $region21: #{tpu_custom_call.1} parent=1 // pred_fallthru
      _
    // Predicated region
    $region22: #{tpu_custom_call.1} parent=1 // pred_check
      _
    $region23: #{tpu_custom_call.1} parent=1 // pred_check_branch
      %53 = sbr.rel (0) target = $region25
    $region24: #{tpu_custom_call.1} parent=1 // pred_region
      _
    $region25: #{tpu_custom_call.1} parent=1 // pred_fallthru
      _
    // Predicated region
    $region26: #{tpu_custom_call.1} parent=1 // pred_check
      _
    $region27: #{tpu_custom_call.1} parent=1 // pred_check_branch
      %55 = sbr.rel (0) target = $region29
    $region28: #{tpu_custom_call.1} parent=1 // pred_region
      %56 = dma.done [#allocation3], 64
    $region29: #{tpu_custom_call.1} parent=1 // pred_fallthru
      _
    // Predicated region
    $region30: #{tpu_custom_call.1} parent=1 // pred_check
      _
    $region31: #{tpu_custom_call.1} parent=1 // pred_check_branch
      %58 = sbr.rel (0) target = $region33
    $region32: #{tpu_custom_call.1} parent=1 // pred_region
      %59 = dma.done [#allocation6], 128
    $region33: #{tpu_custom_call.1} parent=1 // pred_fallthru
      _
    // Predicated region
    $region34: #{tpu_custom_call.1} parent=1 // pred_check
      _
    $region35: #{tpu_custom_call.1} parent=1 // pred_check_branch
      %61 = sbr.rel (0) target = $region37
    $region36: #{tpu_custom_call.1} parent=1 // pred_region
      %62 = dma.done [#allocation6], 512
    $region37: #{tpu_custom_call.1} parent=1 // pred_fallthru
      _
    %v64 = vld [vmem:[#allocation2] sm:$0xf]
    %v65 = vld [vmem:[#allocation5] sm:$0xf]
    %v66 = vld [vmem:[#allocation5 + $0x4] sm:$0xf]
    %v67 = vld [vmem:[%s2] sm:$0x1]
    %v69 = vlaneseq
    %v70 = vshrl.u32 %v69, 7
    %v71 = vsub.s32 0, %v70
    %v72 = vrot.slane %v67, %v71
    %v76 = vunpack.c.l.b16 %v65
    %v77 = vunpack.c.l.b16 %v66
    %v78 = vpack.c.b16 %v77, %v76
    %vm80 = vcmask 130048
    %v82 = vsel %vm80, %v64, 0
    %84 = vmatprep.subr.bf16.mxu0 0
    %85 = vmatpush1.bf16.msra.mxu0 %v78
    %86 = vmatprep.subr.bf16.mxu0 0
    %87 = vmatpush1.bf16.msra.mxu0 0
    %88 = vmatprep.subr.bf16.mxu0 0
    %89 = vmatpush1.bf16.msra.mxu0 0
    %90 = vmatprep.subr.bf16.mxu0 0
    %91 = vmatpush1.bf16.msra.mxu0 0
    %92 = vmatprep.subr.bf16.mxu0 0
    %93 = vmatpush1.bf16.msra.mxu0 0
    %94 = vmatprep.subr.bf16.mxu0 0
    %95 = vmatpush1.bf16.msra.mxu0 0
    %96 = vmatprep.subr.bf16.mxu0 0
    %97 = vmatpush1.bf16.msra.mxu0 0
    %98 = vmatprep.subr.bf16.mxu0 0
    %99 = vmatpush1.bf16.msra.mxu0 0
    %100 = vmatprep.subr.bf16.mxu0 0
    %101 = vmatpush1.bf16.msra.mxu0 0
    %102 = vmatprep.subr.bf16.mxu0 0
    %103 = vmatpush1.bf16.msra.mxu0 0
    %104 = vmatprep.subr.bf16.mxu0 0
    %105 = vmatpush1.bf16.msra.mxu0 0
    %106 = vmatprep.subr.bf16.mxu0 0
    %107 = vmatpush1.bf16.msra.mxu0 0
    %108 = vmatprep.subr.bf16.mxu0 0
    %109 = vmatpush1.bf16.msra.mxu0 0
    %110 = vmatprep.subr.bf16.mxu0 0
    %111 = vmatpush1.bf16.msra.mxu0 0
    %112 = vmatprep.subr.bf16.mxu0 0
    %113 = vmatpush1.bf16.msra.mxu0 0
    %114 = vmatprep.subr.bf16.mxu0 0
    %115 = vmatpush1.bf16.msra.mxu0 0
    %116 = vmatprep.mubr.bf16.mxu0 0
    %117 = vmatmul.mubr.bf16.gmra.mrb[0].mxu0 %v82
    %v118 = vpop.f32.mrb[0].mxu0
    %v119 = vadd.f32 %v72, %v118
    %v120 = vpop.f32.mrb[0].mxu0
    %v121 = vpop.f32.mrb[0].mxu0
    %v122 = vpop.f32.mrb[0].mxu0
    %123 = vdwg.mxu0
    %v124 = vmax.f32 %v119, 0.0
    %v125 = vpack.c.bf16 %v124, %v124
    %v126 = vld [vmem:[#allocation7] sm:$0xff]
    %v127 = vld [vmem:[#allocation7 + $0x8] sm:$0xff]
    %v128 = vld [vmem:[#allocation7 + $0x10] sm:$0xff]
    %v129 = vld [vmem:[#allocation7 + $0x18] sm:$0xff]
    %v130 = vld [vmem:[%s4] sm:$0x3]
    %v132 = vlaneseq
    %v133 = vshrl.u32 %v132, 7
    %v134 = vsub.s32 0, %v133
    %v135 = vrot.slane %v130, %v134
    %v136 = vlaneseq
    %v137 = vshrl.u32 %v136, 7
    %v138 = vsub.s32 1, %v137
    %v139 = vrot.slane %v130, %v138
    %v146 = vunpack.c.l.b16 %v126
    %v147 = vunpack.c.h.b16 %v126
    %v148 = vunpack.c.l.b16 %v127
    %v149 = vunpack.c.h.b16 %v127
    %v150 = vunpack.c.l.b16 %v128
    %v151 = vunpack.c.h.b16 %v128
    %v152 = vunpack.c.l.b16 %v129
    %v153 = vunpack.c.h.b16 %v129
    %v154 = vpack.c.b16 %v148, %v146
    %v155 = vpack.c.b16 %v149, %v147
    %v156 = vpack.c.b16 %v152, %v150
    %v157 = vpack.c.b16 %v153, %v151
    %vm162 = vcmask 261120
    %v164 = vsel %vm162, %v125, 0
    %166 = vmatprep.subr.bf16.mxu0 %v155
    %167 = vmatpush1.bf16.msra.mxu0 %v154
    %168 = vmatprep.subr.bf16.mxu0 %v157
    %169 = vmatpush1.bf16.msra.mxu0 %v156
    %170 = vmatprep.subr.bf16.mxu0 0
    %171 = vmatpush1.bf16.msra.mxu0 0
    %172 = vmatprep.subr.bf16.mxu0 0
    %173 = vmatpush1.bf16.msra.mxu0 0
    %174 = vmatprep.subr.bf16.mxu0 0
    %175 = vmatpush1.bf16.msra.mxu0 0
    %176 = vmatprep.subr.bf16.mxu0 0
    %177 = vmatpush1.bf16.msra.mxu0 0
    %178 = vmatprep.subr.bf16.mxu0 0
    %179 = vmatpush1.bf16.msra.mxu0 0
    %180 = vmatprep.subr.bf16.mxu0 0
    %181 = vmatpush1.bf16.msra.mxu0 0
    %182 = vmatprep.subr.bf16.mxu0 0
    %183 = vmatpush1.bf16.msra.mxu0 0
    %184 = vmatprep.subr.bf16.mxu0 0
    %185 = vmatpush1.bf16.msra.mxu0 0
    %186 = vmatprep.subr.bf16.mxu0 0
    %187 = vmatpush1.bf16.msra.mxu0 0
    %188 = vmatprep.subr.bf16.mxu0 0
    %189 = vmatpush1.bf16.msra.mxu0 0
    %190 = vmatprep.subr.bf16.mxu0 0
    %191 = vmatpush1.bf16.msra.mxu0 0
    %192 = vmatprep.subr.bf16.mxu0 0
    %193 = vmatpush1.bf16.msra.mxu0 0
    %194 = vmatprep.subr.bf16.mxu0 0
    %195 = vmatpush1.bf16.msra.mxu0 0
    %196 = vmatprep.subr.bf16.mxu0 0
    %197 = vmatpush1.bf16.msra.mxu0 0
    %198 = vmatprep.mubr.bf16.mxu0 0
    %199 = vmatmul.mubr.bf16.gmra.mrb[0].mxu0 %v164
    %v200 = vpop.f32.mrb[0].mxu0
    %v201 = vadd.f32 %v135, %v200
    %v202 = vpop.f32.mrb[0].mxu0
    %v203 = vadd.f32 %v139, %v202
    %v204 = vpop.f32.mrb[0].mxu0
    %v205 = vpop.f32.mrb[0].mxu0
    %206 = vdwg.mxu0
    %v207 = vmax.f32 %v203, 0.0
    %vm208 = vcmp.ne.f32.partialorder %v203, %v203
    %v209 = vadd.f32 %v203, 0.0
    %v210 = vand.u32 2147483647, %v203
    %v211 = vsub.f32 0.0, %v210
    %v212 = vmul.f32 %v211, 1.442695
    %v213 = vpow.pop %v212
    %v214 = vadd.f32 %v213, 1.0
    %v215 = vlog2.pop %v214
    %v216 = vmul.f32 %v215, 0.6931472
    %v217 = vmul.f32 -0.5, %v213
    %v218 = vadd.f32 %v217, 1.0
    %v219 = vmul.f32 %v218, %v213
    %v220 = vand.u32 2147483647, %v213
    %vm221 = vcmp.lt.f32.partialorder %v220, 0.0004427343
    %v222 = vsel %vm221, %v219, %v216
    %v223 = vadd.f32 %v207, %v222
    %v224 = vsel %vm208, %v209, %v223
    %v225 = vld [vmem:[%s5] sm:$0xff]
    %v226 = vmul.f32 %v224, %v225
    %v227 = vadd.f32 %v201, %v226
    %v228 = vmul.f32 %v225, -0.5
    %v229 = vmul.f32 %v228, %v225
    %v230 = vlog2.pop %v224
    %v231 = vmul.f32 %v230, 0.6931472
    %v232 = vsub.f32 %v229, %v231
    %v233 = vsub.f32 %v232, 0.9189385
    %v234 = vsub.f32 0.6931472, %v227
    %v235 = vmul.f32 %v227, -2.0
    %v236 = vmax.f32 %v235, 0.0
    %vm237 = vcmp.ne.f32.partialorder %v235, %v235
    %v238 = vadd.f32 %v235, 0.0
    %v239 = vand.u32 2147483647, %v235
    %v240 = vsub.f32 0.0, %v239
    %v241 = vmul.f32 %v240, 1.442695
    %v242 = vpow.pop %v241
    %v243 = vadd.f32 %v242, 1.0
    %v244 = vlog2.pop %v243
    %v245 = vmul.f32 %v244, 0.6931472
    %v246 = vmul.f32 -0.5, %v242
    %v247 = vadd.f32 %v246, 1.0
    %v248 = vmul.f32 %v247, %v242
    %v249 = vand.u32 2147483647, %v242
    %vm250 = vcmp.lt.f32.partialorder %v249, 0.0004427343
    %v251 = vsel %vm250, %v248, %v245
    %v252 = vadd.f32 %v236, %v251
    %v253 = vsel %vm237, %v238, %v252
    %v254 = vsub.f32 %v234, %v253
    %v255 = vmul.f32 %v254, 2.0
    %v256 = vsub.f32 %v233, %v255
    %v257 = vtanh.pop %v227
    %v258 = vmul.f32 %v257, 2.0
    %259 = vst [vmem:[#allocation8] sm:$0xff] %v258
    %260 = vst [vmem:[#allocation8 + $0x8] sm:$0xff] %v256
    // Predicated region
    $region38: #{tpu_custom_call.1} parent=1 // pred_check
      _
    $region39: #{tpu_custom_call.1} parent=1 // pred_check_branch
      %262 = sbr.rel (0) target = $region41
    $region40: #{tpu_custom_call.1} parent=1 // pred_region
      %s264 = ssub.s32 256, 256
      %265 = vsyncadd [#allocation4], %s264
      %s267 = sshll.u32 [#allocation8], 4
      %s268 = int_to_ptr.vmem [resolvable:$true] %s267
      %270 = dma.vmem_to_hbm [thread:$0]  %s268, 256, %s6, [#allocation4]
    $region41: #{tpu_custom_call.1} parent=1 // pred_fallthru
      _
    // Predicated region
    $region42: #{tpu_custom_call.1} parent=1 // pred_check
      _
    $region43: #{tpu_custom_call.1} parent=1 // pred_check_branch
      %272 = sbr.rel (0) target = $region45
    $region44: #{tpu_custom_call.1} parent=1 // pred_region
      %273 = dma.done [#allocation4], 256
    $region45: #{tpu_custom_call.1} parent=1 // pred_fallthru
      _
    %274 = vsyncpa [#allocation3], 1
    %275 = vsyncpa [#allocation6], 1
    %276 = vsyncpa [#allocation4], 1

</llo_original>
